<compile_context>
chip_gen: v6e
topology: v6e:2x2x1
jax: 0.10.0
libtpu: 0.0.40
codegen_flags: <defaults>
</compile_context>

<pallas_src>
import jax
import jax.numpy as jnp
from jax.experimental import pallas as pl
from jax.experimental.pallas import tpu as pltpu

LANE = 128  # lane-dense output slab width (last dim multiple of 128)


def fairgnn_kernel(a_ref, x_ref,
                   w1_ref, b1_ref, w2_ref, b2_ref,
                   wh_ref, bh_ref,
                   out_ref):
    """One grid step == one graph. a/x/weights arrive in bf16, biases in fp32."""
    bf16 = jnp.bfloat16
    a = a_ref[...]                      # [N, N]  bf16
    x = x_ref[...]                      # [N, F]  bf16

    # --- GCN layer 1: relu(A @ (X @ W1) + b1) ---  (bf16 MXU, fp32 accumulate)
    xw1 = jnp.dot(x, w1_ref[...], preferred_element_type=jnp.float32)       # [N, H] f32
    h = jnp.dot(a, xw1.astype(bf16), preferred_element_type=jnp.float32)    # [N, H] f32
    h = jnp.maximum(h + b1_ref[...], 0.0)
    # dropout: eval-mode identity

    # --- GCN layer 2: A @ (H @ W2) + b2 ---
    hw2 = jnp.dot(h.astype(bf16), w2_ref[...], preferred_element_type=jnp.float32)
    z = jnp.dot(a, hw2.astype(bf16), preferred_element_type=jnp.float32) + b2_ref[...]

    # --- fused classifier heads: [N, H] @ [H, 2] -> [N, 2]  (y | s) ---
    heads = jnp.dot(z.astype(bf16), wh_ref[...],
                    preferred_element_type=jnp.float32) + bh_ref[...]

    # --- single lane-dense output slab: [z | y | s | 0-pad] -> [N, 128] ---
    n, h_dim = z.shape
    pad = jnp.zeros((n, LANE - h_dim - heads.shape[1]), jnp.float32)
    out_ref[...] = jnp.concatenate([z, heads, pad], axis=-1)


def fairgnn_forward(a_hat, x, params):
    """a_hat: [B, N, N], x: [B, N, F].  Returns (z [B,N,H], y [B,N,1], s [B,N,1])."""
    B, N, F = x.shape
    H = params["w1"].shape[1]
    assert H + 2 <= LANE, "hidden dim + 2 heads must fit in one 128-lane slab"

    bf16 = jnp.bfloat16
    a_b = a_hat.astype(bf16)
    x_b = x.astype(bf16)
    w1 = params["w1"].astype(bf16)
    w2 = params["w2"].astype(bf16)
    # fuse the two 1-output heads into one [H, 2] weight / [1, 2] bias
    wh = jnp.concatenate([params["wc"], params["ws"]], axis=1).astype(bf16)
    bh = jnp.concatenate([params["bc"], params["bs"]], axis=1)   # fp32
    b1, b2 = params["b1"], params["b2"]                          # fp32

    # NOTE: H=32 underfills MXU lanes; padding NHID to 128 (or packing several
    # weight sets along lanes) would raise MXU utilization but changes the
    # module's hidden size, so it is left as-is.

    batched = lambda shape: pl.BlockSpec((None,) + shape, lambda b: (b, 0, 0))
    shared = lambda shape: pl.BlockSpec(shape, lambda b: (0, 0))

    out = pl.pallas_call(
        fairgnn_kernel,
        out_shape=jax.ShapeDtypeStruct((B, N, LANE), jnp.float32),
        grid=(B,),
        in_specs=[
            batched((N, N)),   # A_hat  (per graph)
            batched((N, F)),   # x      (per graph)
            shared((F, H)),    # W1
            shared((1, H)),    # b1
            shared((H, H)),    # W2
            shared((1, H)),    # b2
            shared((H, 2)),    # [Wc | Ws]
            shared((1, 2)),    # [bc | bs]
        ],
        out_specs=batched((N, LANE)),
        compiler_params=pltpu.CompilerParams(
            dimension_semantics=("parallel",)),   # v7x: graphs split across TCs
    )(a_b, x_b, w1, b1, w2, b2, wh, bh)

    z = out[:, :, :H]
    y = out[:, :, H:H + 1]
    s = out[:, :, H + 1:H + 2]
    return z, y, s


def build_normalized_adjacency(key, n):
    # deterministic random undirected graph; A_hat = D^-1/2 (A + I) D^-1/2
    probs = jax.random.uniform(key, (n, n))
    adj = (probs < 0.15).astype(jnp.float32)
    adj = jnp.maximum(adj, adj.T)                       # symmetric
    adj = adj + jnp.eye(n, dtype=jnp.float32)           # self loops
    deg = jnp.sum(adj, axis=1)
    d_inv_sqrt = 1.0 / jnp.sqrt(deg)
    return adj * d_inv_sqrt[:, None] * d_inv_sqrt[None, :]


def init_params(key, nfeat, nhid):
    ks = jax.random.split(key, 6)
    scale1 = 1.0 / jnp.sqrt(nfeat)
    scale2 = 1.0 / jnp.sqrt(nhid)
    return {
        # GCN body
        "w1": jax.random.uniform(ks[0], (nfeat, nhid), minval=-scale1, maxval=scale1),
        "b1": jnp.zeros((1, nhid), jnp.float32),
        "w2": jax.random.uniform(ks[1], (nhid, nhid), minval=-scale2, maxval=scale2),
        "b2": jnp.zeros((1, nhid), jnp.float32),
        # classifier (nn.Linear(nhid, 1)): stored pre-transposed [H, 1]
        "wc": jax.random.uniform(ks[2], (nhid, 1), minval=-scale2, maxval=scale2),
        "bc": jax.random.uniform(ks[3], (1, 1), minval=-scale2, maxval=scale2),
        # classifierSen (nn.Linear(nhid, 1))
        "ws": jax.random.uniform(ks[4], (nhid, 1), minval=-scale2, maxval=scale2),
        "bs": jax.random.uniform(ks[5], (1, 1), minval=-scale2, maxval=scale2),
    }


def reference_forward(a_hat, x, params):
    # full-fp32 pure-JAX reference
    h = jnp.maximum(jnp.matmul(a_hat, x @ params["w1"]) + params["b1"], 0.0)
    z = jnp.matmul(a_hat, h @ params["w2"]) + params["b2"]
    y = z @ params["wc"] + params["bc"]
    s = z @ params["ws"] + params["bs"]
    return z, y, s


if __name__ == "__main__":
    B, N, NFEAT, NHID = 2, 64, 32, 32   # 2 small graphs: 64 nodes, 32 feats, num_hidden=32

    key = jax.random.PRNGKey(0)
    k_adj, k_x, k_p = jax.random.split(key, 3)

    adj_keys = jax.random.split(k_adj, B)
    a_hat = jnp.stack([build_normalized_adjacency(k, N) for k in adj_keys])
    x = jax.random.normal(k_x, (B, N, NFEAT), dtype=jnp.float32)
    params = init_params(k_p, NFEAT, NHID)

    z, y, s = fairgnn_forward(a_hat, x, params)
    jax.block_until_ready((z, y, s))

    # fp32 reference; kernel uses bf16 MXU inputs so tolerance is relaxed.
    z_ref, y_ref, s_ref = reference_forward(a_hat, x, params)
    assert jnp.allclose(z, z_ref, atol=2e-2), float(jnp.max(jnp.abs(z - z_ref)))
    assert jnp.allclose(y, y_ref, atol=2e-2), float(jnp.max(jnp.abs(y - y_ref)))
    assert jnp.allclose(s, s_ref, atol=2e-2), float(jnp.max(jnp.abs(s - s_ref)))

    print("KERNEL_OK")
</pallas_src>

<mosaic_0001>
module attributes {stable_mosaic.version = 11 : i64} {
  func.func @fairgnn_kernel(%arg0: i32, %arg1: memref<1x64x64xbf16, #tpu.memory_space<vmem>>, %arg2: memref<1x64x32xbf16, #tpu.memory_space<vmem>>, %arg3: memref<32x32xbf16, #tpu.memory_space<vmem>>, %arg4: memref<1x32xf32, #tpu.memory_space<vmem>>, %arg5: memref<32x32xbf16, #tpu.memory_space<vmem>>, %arg6: memref<1x32xf32, #tpu.memory_space<vmem>>, %arg7: memref<32x2xbf16, #tpu.memory_space<vmem>>, %arg8: memref<1x2xf32, #tpu.memory_space<vmem>>, %arg9: memref<1x64x128xf32, #tpu.memory_space<vmem>>) attributes {dimension_semantics = [#tpu.dimension_semantics<parallel>], iteration_bounds = array<i64: 2>, scalar_prefetch = 0 : i64, scratch_operands = 0 : i64, tpu.core_type = #tpu.core_type<tc>, window_params = [{transform_indices = @transform_0, window_bounds = array<i64: 1, 64, 64>}, {transform_indices = @transform_1, window_bounds = array<i64: 1, 64, 32>}, {pipeline_mode = #tpu.pipeline_mode<synchronous>, transform_indices = @transform_2, window_bounds = array<i64: 32, 32>}, {pipeline_mode = #tpu.pipeline_mode<synchronous>, transform_indices = @transform_3, window_bounds = array<i64: 1, 32>}, {pipeline_mode = #tpu.pipeline_mode<synchronous>, transform_indices = @transform_4, window_bounds = array<i64: 32, 32>}, {pipeline_mode = #tpu.pipeline_mode<synchronous>, transform_indices = @transform_5, window_bounds = array<i64: 1, 32>}, {pipeline_mode = #tpu.pipeline_mode<synchronous>, transform_indices = @transform_6, window_bounds = array<i64: 32, 2>}, {pipeline_mode = #tpu.pipeline_mode<synchronous>, transform_indices = @transform_7, window_bounds = array<i64: 1, 2>}, {transform_indices = @transform_8, window_bounds = array<i64: 1, 64, 128>}]} {
    %c0 = arith.constant 0 : index
    %c0_0 = arith.constant 0 : index
    %c0_1 = arith.constant 0 : index
    %0 = vector.load %arg1[%c0, %c0_0, %c0_1] : memref<1x64x64xbf16, #tpu.memory_space<vmem>>, vector<1x64x64xbf16>
    %1 = vector.shape_cast %0 : vector<1x64x64xbf16> to vector<64x64xbf16>
    %c0_2 = arith.constant 0 : index
    %c0_3 = arith.constant 0 : index
    %c0_4 = arith.constant 0 : index
    %2 = vector.load %arg2[%c0_2, %c0_3, %c0_4] : memref<1x64x32xbf16, #tpu.memory_space<vmem>>, vector<1x64x32xbf16>
    %3 = vector.shape_cast %2 : vector<1x64x32xbf16> to vector<64x32xbf16>
    %c0_5 = arith.constant 0 : index
    %c0_6 = arith.constant 0 : index
    %4 = vector.load %arg3[%c0_5, %c0_6] : memref<32x32xbf16, #tpu.memory_space<vmem>>, vector<32x32xbf16>
    %cst = arith.constant dense<0.000000e+00> : vector<64x32xf32>
    %5 = tpu.matmul %3, %4, %cst {dimension_numbers = #tpu.dot_dimension_numbers<[1], [0], [0], [1], [0, 0, 1, 1], [], []>} : vector<64x32xbf16>, vector<32x32xbf16>, vector<64x32xf32> -> vector<64x32xf32>
    %6 = arith.truncf %5 : vector<64x32xf32> to vector<64x32xbf16>
    %cst_7 = arith.constant dense<0.000000e+00> : vector<64x32xf32>
    %7 = tpu.matmul %1, %6, %cst_7 {dimension_numbers = #tpu.dot_dimension_numbers<[1], [0], [0], [1], [0, 0, 1, 1], [], []>} : vector<64x64xbf16>, vector<64x32xbf16>, vector<64x32xf32> -> vector<64x32xf32>
    %c0_8 = arith.constant 0 : index
    %c0_9 = arith.constant 0 : index
    %8 = vector.load %arg4[%c0_8, %c0_9] : memref<1x32xf32, #tpu.memory_space<vmem>>, vector<1x32xf32>
    %9 = vector.broadcast %8 : vector<1x32xf32> to vector<64x32xf32>
    %10 = arith.addf %7, %9 : vector<64x32xf32>
    %cst_10 = arith.constant 0.000000e+00 : f32
    %11 = vector.broadcast %cst_10 : f32 to vector<64x32xf32>
    %12 = arith.maximumf %10, %11 : vector<64x32xf32>
    %13 = arith.truncf %12 : vector<64x32xf32> to vector<64x32xbf16>
    %c0_11 = arith.constant 0 : index
    %c0_12 = arith.constant 0 : index
    %14 = vector.load %arg5[%c0_11, %c0_12] : memref<32x32xbf16, #tpu.memory_space<vmem>>, vector<32x32xbf16>
    %cst_13 = arith.constant dense<0.000000e+00> : vector<64x32xf32>
    %15 = tpu.matmul %13, %14, %cst_13 {dimension_numbers = #tpu.dot_dimension_numbers<[1], [0], [0], [1], [0, 0, 1, 1], [], []>} : vector<64x32xbf16>, vector<32x32xbf16>, vector<64x32xf32> -> vector<64x32xf32>
    %16 = arith.truncf %15 : vector<64x32xf32> to vector<64x32xbf16>
    %cst_14 = arith.constant dense<0.000000e+00> : vector<64x32xf32>
    %17 = tpu.matmul %1, %16, %cst_14 {dimension_numbers = #tpu.dot_dimension_numbers<[1], [0], [0], [1], [0, 0, 1, 1], [], []>} : vector<64x64xbf16>, vector<64x32xbf16>, vector<64x32xf32> -> vector<64x32xf32>
    %c0_15 = arith.constant 0 : index
    %c0_16 = arith.constant 0 : index
    %18 = vector.load %arg6[%c0_15, %c0_16] : memref<1x32xf32, #tpu.memory_space<vmem>>, vector<1x32xf32>
    %19 = vector.broadcast %18 : vector<1x32xf32> to vector<64x32xf32>
    %20 = arith.addf %17, %19 : vector<64x32xf32>
    %21 = arith.truncf %20 : vector<64x32xf32> to vector<64x32xbf16>
    %c0_17 = arith.constant 0 : index
    %c0_18 = arith.constant 0 : index
    %22 = vector.load %arg7[%c0_17, %c0_18] : memref<32x2xbf16, #tpu.memory_space<vmem>>, vector<32x2xbf16>
    %cst_19 = arith.constant dense<0.000000e+00> : vector<64x2xf32>
    %23 = tpu.matmul %21, %22, %cst_19 {dimension_numbers = #tpu.dot_dimension_numbers<[1], [0], [0], [1], [0, 0, 1, 1], [], []>} : vector<64x32xbf16>, vector<32x2xbf16>, vector<64x2xf32> -> vector<64x2xf32>
    %c0_20 = arith.constant 0 : index
    %c0_21 = arith.constant 0 : index
    %24 = vector.load %arg8[%c0_20, %c0_21] : memref<1x2xf32, #tpu.memory_space<vmem>>, vector<1x2xf32>
    %25 = vector.broadcast %24 : vector<1x2xf32> to vector<64x2xf32>
    %26 = arith.addf %23, %25 : vector<64x2xf32>
    %cst_22 = arith.constant 0.000000e+00 : f32
    %27 = vector.broadcast %cst_22 : f32 to vector<64x94xf32>
    %28 = tpu.concatenate %20, %26, %27 in 1 : vector<64x32xf32>, vector<64x2xf32>, vector<64x94xf32> -> vector<64x128xf32>
    %c0_23 = arith.constant 0 : index
    %c0_24 = arith.constant 0 : index
    %c0_25 = arith.constant 0 : index
    %29 = vector.load %arg9[%c0_23, %c0_24, %c0_25] : memref<1x64x128xf32, #tpu.memory_space<vmem>>, vector<1x64x128xf32>
    %30 = vector.shape_cast %29 : vector<1x64x128xf32> to vector<64x128xf32>
    %31 = vector.shape_cast %28 : vector<64x128xf32> to vector<1x64x128xf32>
    tpu.vector_store %arg9[%c0_23, %c0_24, %c0_25], %31 {strides = array<i32>} : memref<1x64x128xf32, #tpu.memory_space<vmem>>, vector<1x64x128xf32>,
    return
  }
  func.func @transform_0(%arg0: i32) -> (i32, i32, i32) {
    %c0_i32 = arith.constant 0 : i32
    %c0_i32_0 = arith.constant 0 : i32
    %c0_i32_1 = arith.constant 0 : i32
    return %arg0, %c0_i32, %c0_i32_0 : i32, i32, i32
  }
  func.func @transform_1(%arg0: i32) -> (i32, i32, i32) {
    %c0_i32 = arith.constant 0 : i32
    %c0_i32_0 = arith.constant 0 : i32
    %c0_i32_1 = arith.constant 0 : i32
    return %arg0, %c0_i32, %c0_i32_0 : i32, i32, i32
  }
  func.func @transform_2(%arg0: i32) -> (i32, i32) {
    %c0_i32 = arith.constant 0 : i32
    %c0_i32_0 = arith.constant 0 : i32
    %c0_i32_1 = arith.constant 0 : i32
    return %c0_i32, %c0_i32_0 : i32, i32
  }
  func.func @transform_3(%arg0: i32) -> (i32, i32) {
    %c0_i32 = arith.constant 0 : i32
    %c0_i32_0 = arith.constant 0 : i32
    %c0_i32_1 = arith.constant 0 : i32
    return %c0_i32, %c0_i32_0 : i32, i32
  }
  func.func @transform_4(%arg0: i32) -> (i32, i32) {
    %c0_i32 = arith.constant 0 : i32
    %c0_i32_0 = arith.constant 0 : i32
    %c0_i32_1 = arith.constant 0 : i32
    return %c0_i32, %c0_i32_0 : i32, i32
  }
  func.func @transform_5(%arg0: i32) -> (i32, i32) {
    %c0_i32 = arith.constant 0 : i32
    %c0_i32_0 = arith.constant 0 : i32
    %c0_i32_1 = arith.constant 0 : i32
    return %c0_i32, %c0_i32_0 : i32, i32
  }
  func.func @transform_6(%arg0: i32) -> (i32, i32) {
    %c0_i32 = arith.constant 0 : i32
    %c0_i32_0 = arith.constant 0 : i32
    %c0_i32_1 = arith.constant 0 : i32
    return %c0_i32, %c0_i32_0 : i32, i32
  }
  func.func @transform_7(%arg0: i32) -> (i32, i32) {
    %c0_i32 = arith.constant 0 : i32
    %c0_i32_0 = arith.constant 0 : i32
    %c0_i32_1 = arith.constant 0 : i32
    return %c0_i32, %c0_i32_0 : i32, i32
  }
  func.func @transform_8(%arg0: i32) -> (i32, i32, i32) {
    %c0_i32 = arith.constant 0 : i32
    %c0_i32_0 = arith.constant 0 : i32
    %c0_i32_1 = arith.constant 0 : i32
    return %arg0, %c0_i32, %c0_i32_0 : i32, i32, i32
  }
}

</mosaic_0001>

<llo_original>
// kernel: tpu_custom_call.1
$region0: #{tpu_custom_call.1}
  #allocation0 [shape = 'u32[]', space=smem, size = 0x4, offset = 0x4, fixed_abs, tag = 'smem constant byte address 0x4 - core index']
  #allocation1 [shape = 'u32[144,128]{1,0:T(1,128)}', space=vmem, size = 0x12000, scoped, tag = 'internal scratch']
  %s0 = inlined_call_operand.vmem [shape: bf16[2,64,64], index: 0, kind: input, shape index: {}]
  %s1 = inlined_call_operand.vmem [shape: bf16[2,64,32], index: 1, kind: input, shape index: {}]
  %s2 = inlined_call_operand.vmem [shape: bf16[32,32], index: 2, kind: input, shape index: {}]
  %s3 = inlined_call_operand.vmem [shape: f32[1,32], index: 3, kind: input, shape index: {}]
  %s4 = inlined_call_operand.vmem [shape: bf16[32,32], index: 4, kind: input, shape index: {}]
  %s5 = inlined_call_operand.vmem [shape: f32[1,32], index: 5, kind: input, shape index: {}]
  %s6 = inlined_call_operand.vmem [shape: bf16[32,2], index: 6, kind: input, shape index: {}]
  %s7 = inlined_call_operand.vmem [shape: f32[1,2], index: 7, kind: input, shape index: {}]
  %s8 = inlined_call_operand.hbm [shape: f32[2,64,128], index: 8, kind: output, shape index: {}]
  %s9 = sld [smem:[#allocation0]]
  $region65: #{tpu_custom_call.1} parent=0
    _
  %s11 = ssub.s32 1, %s9
  %s12 = scalar_select 0, %s11, %s9
  $region1: #{tpu_custom_call.1} parent=0
    #allocation2 [shape = 'u8[65536]{0}', space=vmem, size = 0x10000, scoped, tag = 'output window, operand 0']
    #allocation3 [shape = 's32[2]{0}', space=sflag, size = 0x8, scoped, tag = 'scoped memory for tpu_custom_call.1']
    %13 = vsyncpa [#allocation3], 0
    %s14 = scalar_lea.sflag [#allocation3], 1
    %15 = vsyncpa %s14, 0
    loop: start=0, step=1, limit=4
    $region2: #{tpu_custom_call.1} parent=1 // loop_pre_header
      _
    $region3: #{tpu_custom_call.1} parent=1 // loop_header
      %s17 = sphi 0, %s21
      %p18 = scmp.ge.s32.totalorder %s17, 4
      %s27 = sphi 0, %s29
      %s30 = sphi 0, %s27
      %s31 = sphi 0, %s30
      %s47 = sphi 0, %s31
      %s53 = sphi 0, %s55
      %s56 = sphi 0, %s53
      %s57 = sphi 0, %s56
      %s73 = sphi 0, %s57
      %s77 = sphi 0, %s77
      %s79 = sphi 0, %s77
      %s80 = sphi 0, %s79
      %s94 = sphi 0, %s80
      %s98 = sphi 0, %s98
      %s100 = sphi 0, %s98
      %s101 = sphi 0, %s100
      %s115 = sphi 0, %s101
      %s119 = sphi 0, %s119
      %s121 = sphi 0, %s119
      %s122 = sphi 0, %s121
      %s136 = sphi 0, %s122
      %s140 = sphi 0, %s140
      %s142 = sphi 0, %s140
      %s143 = sphi 0, %s142
      %s157 = sphi 0, %s143
      %s161 = sphi 0, %s161
      %s163 = sphi 0, %s161
      %s164 = sphi 0, %s163
      %s178 = sphi 0, %s164
      %s182 = sphi 0, %s182
      %s184 = sphi 0, %s182
      %s185 = sphi 0, %s184
      %s199 = sphi 0, %s185
      %s205 = sphi 0, %s207
      %s208 = sphi 0, %s205
      %s209 = sphi 0, %s208
      %s225 = sphi 0, %s209
    $region4: #{tpu_custom_call.1} parent=1 // loop_header_branch
      %20 = sbr.rel (%p18) target = $region8
    $region5: #{tpu_custom_call.1} parent=1 // loop_body
      %s22 = ssub.s32 %s17, 1
      %s23 = ssub.s32 %s17, 2
      %s24 = sadd.s32 %s17, 1
      %s25 = ssub.s32 %s17, %s24
      %p26 = scmp.eq.s32.totalorder %s25, 0
      %s28 = sadd.s32 %s27, 1
      %s29 = scalar_select %p26, %s27, %s28
      %p32 = pneg %p26
      %p33 = scmp.eq.s32.totalorder %s17, 1
      %p34 = por %p32, %p33
      %p35 = scmp.ne.s32.totalorder %s27, %s30
      %p36 = scmp.eq.s32.totalorder %s17, 0
      %p37 = por %p35, %p36
      %p38 = scmp.ne.s32.totalorder %s27, %s30
      %p39 = scmp.eq.s32.totalorder %s22, 1
      %p40 = por %p38, %p39
      %p41 = scmp.ne.s32.totalorder %s30, %s31
      %p42 = scmp.eq.s32.totalorder %s22, 0
      %p43 = por %p41, %p42
      %p44 = scmp.ne.s32.totalorder %s30, %s31
      %p45 = scmp.eq.s32.totalorder %s23, 1
      %p46 = por %p44, %p45
      %p48 = scmp.ne.s32.totalorder %s31, %s47
      %p49 = scmp.eq.s32.totalorder %s23, 0
      %p50 = por %p48, %p49
      %s51 = ssub.s32 %s17, %s24
      %p52 = scmp.eq.s32.totalorder %s51, 0
      %s54 = sadd.s32 %s53, 1
      %s55 = scalar_select %p52, %s53, %s54
      %p58 = pneg %p52
      %p59 = scmp.eq.s32.totalorder %s17, 1
      %p60 = por %p58, %p59
      %p61 = scmp.ne.s32.totalorder %s53, %s56
      %p62 = scmp.eq.s32.totalorder %s17, 0
      %p63 = por %p61, %p62
      %p64 = scmp.ne.s32.totalorder %s53, %s56
      %p65 = scmp.eq.s32.totalorder %s22, 1
      %p66 = por %p64, %p65
      %p67 = scmp.ne.s32.totalorder %s56, %s57
      %p68 = scmp.eq.s32.totalorder %s22, 0
      %p69 = por %p67, %p68
      %p70 = scmp.ne.s32.totalorder %s56, %s57
      %p71 = scmp.eq.s32.totalorder %s23, 1
      %p72 = por %p70, %p71
      %p74 = scmp.ne.s32.totalorder %s57, %s73
      %p75 = scmp.eq.s32.totalorder %s23, 0
      %p76 = por %p74, %p75
      %s78 = sadd.s32 %s77, 1
      %p81 = scmp.eq.s32.totalorder %s17, 1
      %p82 = scmp.ne.s32.totalorder %s77, %s79
      %p83 = scmp.eq.s32.totalorder %s17, 0
      %p84 = por %p82, %p83
      %p85 = scmp.ne.s32.totalorder %s77, %s79
      %p86 = scmp.eq.s32.totalorder %s22, 1
      %p87 = por %p85, %p86
      %p88 = scmp.ne.s32.totalorder %s79, %s80
      %p89 = scmp.eq.s32.totalorder %s22, 0
      %p90 = por %p88, %p89
      %p91 = scmp.ne.s32.totalorder %s79, %s80
      %p92 = scmp.eq.s32.totalorder %s23, 1
      %p93 = por %p91, %p92
      %p95 = scmp.ne.s32.totalorder %s80, %s94
      %p96 = scmp.eq.s32.totalorder %s23, 0
      %p97 = por %p95, %p96
      %s99 = sadd.s32 %s98, 1
      %p102 = scmp.eq.s32.totalorder %s17, 1
      %p103 = scmp.ne.s32.totalorder %s98, %s100
      %p104 = scmp.eq.s32.totalorder %s17, 0
      %p105 = por %p103, %p104
      %p106 = scmp.ne.s32.totalorder %s98, %s100
      %p107 = scmp.eq.s32.totalorder %s22, 1
      %p108 = por %p106, %p107
      %p109 = scmp.ne.s32.totalorder %s100, %s101
      %p110 = scmp.eq.s32.totalorder %s22, 0
      %p111 = por %p109, %p110
      %p112 = scmp.ne.s32.totalorder %s100, %s101
      %p113 = scmp.eq.s32.totalorder %s23, 1
      %p114 = por %p112, %p113
      %p116 = scmp.ne.s32.totalorder %s101, %s115
      %p117 = scmp.eq.s32.totalorder %s23, 0
      %p118 = por %p116, %p117
      %s120 = sadd.s32 %s119, 1
      %p123 = scmp.eq.s32.totalorder %s17, 1
      %p124 = scmp.ne.s32.totalorder %s119, %s121
      %p125 = scmp.eq.s32.totalorder %s17, 0
      %p126 = por %p124, %p125
      %p127 = scmp.ne.s32.totalorder %s119, %s121
      %p128 = scmp.eq.s32.totalorder %s22, 1
      %p129 = por %p127, %p128
      %p130 = scmp.ne.s32.totalorder %s121, %s122
      %p131 = scmp.eq.s32.totalorder %s22, 0
      %p132 = por %p130, %p131
      %p133 = scmp.ne.s32.totalorder %s121, %s122
      %p134 = scmp.eq.s32.totalorder %s23, 1
      %p135 = por %p133, %p134
      %p137 = scmp.ne.s32.totalorder %s122, %s136
      %p138 = scmp.eq.s32.totalorder %s23, 0
      %p139 = por %p137, %p138
      %s141 = sadd.s32 %s140, 1
      %p144 = scmp.eq.s32.totalorder %s17, 1
      %p145 = scmp.ne.s32.totalorder %s140, %s142
      %p146 = scmp.eq.s32.totalorder %s17, 0
      %p147 = por %p145, %p146
      %p148 = scmp.ne.s32.totalorder %s140, %s142
      %p149 = scmp.eq.s32.totalorder %s22, 1
      %p150 = por %p148, %p149
      %p151 = scmp.ne.s32.totalorder %s142, %s143
      %p152 = scmp.eq.s32.totalorder %s22, 0
      %p153 = por %p151, %p152
      %p154 = scmp.ne.s32.totalorder %s142, %s143
      %p155 = scmp.eq.s32.totalorder %s23, 1
      %p156 = por %p154, %p155
      %p158 = scmp.ne.s32.totalorder %s143, %s157
      %p159 = scmp.eq.s32.totalorder %s23, 0
      %p160 = por %p158, %p159
      %s162 = sadd.s32 %s161, 1
      %p165 = scmp.eq.s32.totalorder %s17, 1
      %p166 = scmp.ne.s32.totalorder %s161, %s163
      %p167 = scmp.eq.s32.totalorder %s17, 0
      %p168 = por %p166, %p167
      %p169 = scmp.ne.s32.totalorder %s161, %s163
      %p170 = scmp.eq.s32.totalorder %s22, 1
      %p171 = por %p169, %p170
      %p172 = scmp.ne.s32.totalorder %s163, %s164
      %p173 = scmp.eq.s32.totalorder %s22, 0
      %p174 = por %p172, %p173
      %p175 = scmp.ne.s32.totalorder %s163, %s164
      %p176 = scmp.eq.s32.totalorder %s23, 1
      %p177 = por %p175, %p176
      %p179 = scmp.ne.s32.totalorder %s164, %s178
      %p180 = scmp.eq.s32.totalorder %s23, 0
      %p181 = por %p179, %p180
      %s183 = sadd.s32 %s182, 1
      %p186 = scmp.eq.s32.totalorder %s17, 1
      %p187 = scmp.ne.s32.totalorder %s182, %s184
      %p188 = scmp.eq.s32.totalorder %s17, 0
      %p189 = por %p187, %p188
      %p190 = scmp.ne.s32.totalorder %s182, %s184
      %p191 = scmp.eq.s32.totalorder %s22, 1
      %p192 = por %p190, %p191
      %p193 = scmp.ne.s32.totalorder %s184, %s185
      %p194 = scmp.eq.s32.totalorder %s22, 0
      %p195 = por %p193, %p194
      %p196 = scmp.ne.s32.totalorder %s184, %s185
      %p197 = scmp.eq.s32.totalorder %s23, 1
      %p198 = por %p196, %p197
      %p200 = scmp.ne.s32.totalorder %s185, %s199
      %p201 = scmp.eq.s32.totalorder %s23, 0
      %p202 = por %p200, %p201
      %s203 = ssub.s32 %s17, %s24
      %p204 = scmp.eq.s32.totalorder %s203, 0
      %s206 = sadd.s32 %s205, 1
      %s207 = scalar_select %p204, %s205, %s206
      %p210 = pneg %p204
      %p211 = scmp.eq.s32.totalorder %s17, 1
      %p212 = por %p210, %p211
      %p213 = scmp.ne.s32.totalorder %s205, %s208
      %p214 = scmp.eq.s32.totalorder %s17, 0
      %p215 = por %p213, %p214
      %p216 = scmp.ne.s32.totalorder %s205, %s208
      %p217 = scmp.eq.s32.totalorder %s22, 1
      %p218 = por %p216, %p217
      %p219 = scmp.ne.s32.totalorder %s208, %s209
      %p220 = scmp.eq.s32.totalorder %s22, 0
      %p221 = por %p219, %p220
      %p222 = scmp.ne.s32.totalorder %s208, %s209
      %p223 = scmp.eq.s32.totalorder %s23, 1
      %p224 = por %p222, %p223
      %p226 = scmp.ne.s32.totalorder %s209, %s225
      %p227 = scmp.eq.s32.totalorder %s23, 0
      %p228 = por %p226, %p227
      %p229 = scmp.le.s32.totalorder 1, %s17
      %p230 = scmp.lt.s32.totalorder %s17, 3
      %p231 = pnand %p229, %p230
      %p232 = pneg %p231
      // Predicated region
      $region9: #{tpu_custom_call.1} parent=5 // pred_check
        _
      $region10: #{tpu_custom_call.1} parent=5 // pred_check_branch
        %234 = sbr.rel (%p231) target = $region12
      $region11: #{tpu_custom_call.1} parent=5 // pred_region
        %s235 = ssub.s32 %s17, 1
        // Predicated region
        $region13: #{tpu_custom_call.1} parent=11 // pred_check
          %p236 = pneg %p90
        $region14: #{tpu_custom_call.1} parent=11 // pred_check_branch
          %238 = sbr.rel (%p236) target = $region16
        $region15: #{tpu_custom_call.1} parent=11 // pred_region
          _
        $region16: #{tpu_custom_call.1} parent=11 // pred_fallthru
          _
        // Predicated region
        $region17: #{tpu_custom_call.1} parent=11 // pred_check
          %p239 = pneg %p111
        $region18: #{tpu_custom_call.1} parent=11 // pred_check_branch
          %241 = sbr.rel (%p239) target = $region20
        $region19: #{tpu_custom_call.1} parent=11 // pred_region
          _
        $region20: #{tpu_custom_call.1} parent=11 // pred_fallthru
          _
        // Predicated region
        $region21: #{tpu_custom_call.1} parent=11 // pred_check
          %p242 = pneg %p132
        $region22: #{tpu_custom_call.1} parent=11 // pred_check_branch
          %244 = sbr.rel (%p242) target = $region24
        $region23: #{tpu_custom_call.1} parent=11 // pred_region
          _
        $region24: #{tpu_custom_call.1} parent=11 // pred_fallthru
          _
        // Predicated region
        $region25: #{tpu_custom_call.1} parent=11 // pred_check
          %p245 = pneg %p153
        $region26: #{tpu_custom_call.1} parent=11 // pred_check_branch
          %247 = sbr.rel (%p245) target = $region28
        $region27: #{tpu_custom_call.1} parent=11 // pred_region
          _
        $region28: #{tpu_custom_call.1} parent=11 // pred_fallthru
          _
        // Predicated region
        $region29: #{tpu_custom_call.1} parent=11 // pred_check
          %p248 = pneg %p174
        $region30: #{tpu_custom_call.1} parent=11 // pred_check_branch
          %250 = sbr.rel (%p248) target = $region32
        $region31: #{tpu_custom_call.1} parent=11 // pred_region
          _
        $region32: #{tpu_custom_call.1} parent=11 // pred_fallthru
          _
        // Predicated region
        $region33: #{tpu_custom_call.1} parent=11 // pred_check
          %p251 = pneg %p195
        $region34: #{tpu_custom_call.1} parent=11 // pred_check_branch
          %253 = sbr.rel (%p251) target = $region36
        $region35: #{tpu_custom_call.1} parent=11 // pred_region
          _
        $region36: #{tpu_custom_call.1} parent=11 // pred_fallthru
          _
      $region12: #{tpu_custom_call.1} parent=5 // pred_fallthru
        _
      %p254 = scmp.lt.s32.totalorder %s17, 2
      // Predicated region
      $region37: #{tpu_custom_call.1} parent=5 // pred_check
        %p255 = pneg %p254
      $region38: #{tpu_custom_call.1} parent=5 // pred_check_branch
        %257 = sbr.rel (%p255) target = $region40
      $region39: #{tpu_custom_call.1} parent=5 // pred_region
        // Predicated region
        $region41: #{tpu_custom_call.1} parent=39 // pred_check
          %p258 = pneg %p37
        $region42: #{tpu_custom_call.1} parent=39 // pred_check_branch
          %260 = sbr.rel (%p258) target = $region44
        $region43: #{tpu_custom_call.1} parent=39 // pred_region
          %p261 = scmp.lt.s32.totalorder %s17, 1
          %s262 = scalar_select %p261, %s17, 1
          %s263 = smul.addr %s262, 8
          %s264 = smul.addr %s263, 4
          %s265 = scalar_lea.vmem %s0, %s264
        $region44: #{tpu_custom_call.1} parent=39 // pred_fallthru
          _
        // Predicated region
        $region45: #{tpu_custom_call.1} parent=39 // pred_check
          %p266 = pneg %p63
        $region46: #{tpu_custom_call.1} parent=39 // pred_check_branch
          %268 = sbr.rel (%p266) target = $region48
        $region47: #{tpu_custom_call.1} parent=39 // pred_region
          %p269 = scmp.lt.s32.totalorder %s17, 1
          %s270 = scalar_select %p269, %s17, 1
          %s271 = smul.addr %s270, 8
          %s272 = smul.addr %s271, 4
          %s273 = scalar_lea.vmem %s1, %s272
        $region48: #{tpu_custom_call.1} parent=39 // pred_fallthru
          _
      $region40: #{tpu_custom_call.1} parent=5 // pred_fallthru
        _
      %p274 = scmp.le.s32.totalorder 1, %s17
      %p275 = scmp.lt.s32.totalorder %s17, 3
      %p276 = pnand %p274, %p275
      %p277 = pneg %p276
      // Predicated region
      $region49: #{tpu_custom_call.1} parent=5 // pred_check
        _
      $region50: #{tpu_custom_call.1} parent=5 // pred_check_branch
        %279 = sbr.rel (%p276) target = $region52
      $region51: #{tpu_custom_call.1} parent=5 // pred_region
        %s280 = ssub.s32 %s17, 1
        %p281 = scmp.lt.s32.totalorder %s22, 1
        %s282 = scalar_select %p281, %s22, 1
        %s283 = smul.addr %s282, 8
        %s284 = smul.addr %s283, 4
        %s285 = scalar_lea.vmem %s0, %s284
        %p286 = pneg %p43
        %p287 = pneg %p40
        %p288 = scmp.lt.s32.totalorder %s22, 1
        %s289 = scalar_select %p288, %s22, 1
        %s290 = smul.addr %s289, 8
        %s291 = smul.addr %s290, 4
        %s292 = scalar_lea.vmem %s1, %s291
        %p293 = pneg %p69
        %p294 = pneg %p66
        %p295 = pneg %p90
        %p296 = pneg %p87
        %p297 = pneg %p111
        %p298 = pneg %p108
        %p299 = pneg %p132
        %p300 = pneg %p129
        %p301 = pneg %p153
        %p302 = pneg %p150
        %p303 = pneg %p174
        %p304 = pneg %p171
        %p305 = pneg %p195
        %p306 = pneg %p192
        %p307 = pneg %p221
        %p308 = pneg %p218
        %s309 = sand.u32 %s208, 1
        %s310 = scalar_lea.sflag [#allocation3], %s309
        %s311 = sand.u32 %s208, 1
        %s312 = smul.addr %s311, 64
        %s313 = scalar_lea.vmem [#allocation2], %s312
        %p314 = scmp.lt.s32.totalorder %s22, 1
        %s315 = scalar_select %p314, %s22, 1
        %s316 = smul.addr %s315, 8
        %s317 = smul.addr %s316, 4
        %s318 = scalar_lea.vmem %s0, %s317
        %p319 = scmp.lt.s32.totalorder %s22, 1
        %s320 = scalar_select %p319, %s22, 1
        %s321 = smul.addr %s320, 8
        %s322 = smul.addr %s321, 4
        %s323 = scalar_lea.vmem %s1, %s322
        %v325 = vld [vmem:[%s318] sm:$0xf]
        %v326 = vld [vmem:[%s318 + $0x4] sm:$0xf]
        %v327 = vld [vmem:[%s318 + $0x8] sm:$0xf]
        %v328 = vld [vmem:[%s318 + $0xc] sm:$0xf]
        %v329 = vld [vmem:[%s318 + $0x10] sm:$0xf]
        %v330 = vld [vmem:[%s318 + $0x14] sm:$0xf]
        %v331 = vld [vmem:[%s318 + $0x18] sm:$0xf]
        %v332 = vld [vmem:[%s318 + $0x1c] sm:$0xf]
        %v333 = vld [vmem:[%s323] sm:$0xf]
        %v334 = vld [vmem:[%s323 + $0x4] sm:$0xf]
        %v335 = vld [vmem:[%s323 + $0x8] sm:$0xf]
        %v336 = vld [vmem:[%s323 + $0xc] sm:$0xf]
        %v337 = vld [vmem:[%s323 + $0x10] sm:$0xf]
        %v338 = vld [vmem:[%s323 + $0x14] sm:$0xf]
        %v339 = vld [vmem:[%s323 + $0x18] sm:$0xf]
        %v340 = vld [vmem:[%s323 + $0x1c] sm:$0xf]
        %v341 = vld [vmem:[%s2] sm:$0xf]
        %v342 = vld [vmem:[%s2 + $0x4] sm:$0xf]
        %v343 = vld [vmem:[%s2 + $0x8] sm:$0xf]
        %v344 = vld [vmem:[%s2 + $0xc] sm:$0xf]
        %v353 = vunpack.c.l.b16 %v333
        %v354 = vunpack.c.l.b16 %v334
        %v355 = vunpack.c.l.b16 %v335
        %v356 = vunpack.c.l.b16 %v336
        %v357 = vunpack.c.l.b16 %v337
        %v358 = vunpack.c.l.b16 %v338
        %v359 = vunpack.c.l.b16 %v339
        %v360 = vunpack.c.l.b16 %v340
        %v361 = vpack.c.b16 %v354, %v353
        %v362 = vpack.c.b16 %v356, %v355
        %v363 = vpack.c.b16 %v358, %v357
        %v364 = vpack.c.b16 %v360, %v359
        %v369 = vunpack.c.l.b16 %v341
        %v370 = vunpack.c.l.b16 %v342
        %v371 = vunpack.c.l.b16 %v343
        %v372 = vunpack.c.l.b16 %v344
        %v373 = vpack.c.b16 %v370, %v369
        %v374 = vpack.c.b16 %v372, %v371
        %vm377 = vcmask 261120
        %v379 = vsel %vm377, %v361, 0
        %v382 = vsel %vm377, %v362, 0
        %v385 = vsel %vm377, %v363, 0
        %v388 = vsel %vm377, %v364, 0
        %390 = vmatprep.subr.bf16.mxu0 0
        %391 = vmatpush1.bf16.msra.mxu0 0
        %392 = vmatprep.subr.bf16.mxu0 0
        %393 = vmatpush1.bf16.msra.mxu0 0
        %394 = vmatprep.subr.bf16.mxu0 0
        %395 = vmatpush1.bf16.msra.mxu0 0
        %396 = vmatprep.subr.bf16.mxu0 0
        %397 = vmatpush1.bf16.msra.mxu0 0
        %398 = vmatprep.subr.bf16.mxu0 0
        %399 = vmatpush1.bf16.msra.mxu0 0
        %400 = vmatprep.subr.bf16.mxu0 0
        %401 = vmatpush1.bf16.msra.mxu0 0
        %402 = vmatprep.subr.bf16.mxu0 0
        %403 = vmatpush1.bf16.msra.mxu0 %v374
        %404 = vmatprep.subr.bf16.mxu0 0
        %405 = vmatpush1.bf16.msra.mxu0 %v373
        %406 = vmatprep.subr.bf16.mxu0 0
        %407 = vmatpush2.bf16.msra.mxu0 0
        %408 = vmatprep.subr.bf16.mxu0 0
        %409 = vmatpush2.bf16.msra.mxu0 0
        %410 = vmatprep.subr.bf16.mxu0 0
        %411 = vmatpush2.bf16.msra.mxu0 0
        %412 = vmatprep.subr.bf16.mxu0 0
        %413 = vmatpush2.bf16.msra.mxu0 0
        %414 = vmatprep.subr.bf16.mxu0 0
        %415 = vmatpush2.bf16.msra.mxu0 0
        %416 = vmatprep.subr.bf16.mxu0 0
        %417 = vmatpush2.bf16.msra.mxu0 0
        %418 = vmatprep.subr.bf16.mxu0 0
        %419 = vmatpush2.bf16.msra.mxu0 0
        %420 = vmatprep.subr.bf16.mxu0 0
        %421 = vmatpush2.bf16.msra.mxu0 0
        %422 = vmatprep.mubr.bf16.mxu0 0
        %423 = vmatmul.mubr.bf16.gmra.mxu0 %v379
        %v424 = vpop.f32.mrf.mxu0
        %v425 = vadd.f32 0.0, %v424
        %v426 = vpop.f32.mrf.mxu0
        %v427 = vpop.f32.mrf.mxu0
        %v428 = vadd.f32 0.0, %v427
        %v429 = vpop.f32.mrf.mxu0
        %430 = vmatprep.mubr.bf16.mxu0 0
        %431 = vmatmul.mubr.bf16.gmra.mxu0 %v382
        %v432 = vpop.f32.mrf.mxu0
        %v433 = vadd.f32 0.0, %v432
        %v434 = vpop.f32.mrf.mxu0
        %v435 = vpop.f32.mrf.mxu0
        %v436 = vadd.f32 0.0, %v435
        %v437 = vpop.f32.mrf.mxu0
        %438 = vmatprep.mubr.bf16.mxu0 0
        %439 = vmatmul.mubr.bf16.gmra.mxu0 %v385
        %v440 = vpop.f32.mrf.mxu0
        %v441 = vadd.f32 0.0, %v440
        %v442 = vpop.f32.mrf.mxu0
        %v443 = vpop.f32.mrf.mxu0
        %v444 = vadd.f32 0.0, %v443
        %v445 = vpop.f32.mrf.mxu0
        %446 = vmatprep.mubr.bf16.mxu0 0
        %447 = vmatmul.mubr.bf16.gmra.mxu0 %v388
        %v448 = vpop.f32.mrf.mxu0
        %v449 = vadd.f32 0.0, %v448
        %v450 = vpop.f32.mrf.mxu0
        %v451 = vpop.f32.mrf.mxu0
        %v452 = vadd.f32 0.0, %v451
        %v453 = vpop.f32.mrf.mxu0
        %454 = vdwg.mxu0
        %v455 = vpack.c.bf16 %v428, %v425
        %v456 = vpack.c.bf16 %v436, %v433
        %v457 = vpack.c.bf16 %v444, %v441
        %v458 = vpack.c.bf16 %v452, %v449
        %v459 = vld [vmem:[%s3] sm:$0x1]
        %v461 = vlaneseq
        %v462 = vshrl.u32 %v461, 7
        %v463 = vsub.s32 0, %v462
        %v464 = vrot.slane %v459, %v463
        %v474 = vunpack.c.l.b16 %v325
        %v475 = vunpack.c.l.b16 %v326
        %v476 = vunpack.c.l.b16 %v327
        %v477 = vunpack.c.l.b16 %v328
        %v478 = vunpack.c.l.b16 %v329
        %v479 = vunpack.c.l.b16 %v330
        %v480 = vunpack.c.l.b16 %v331
        %v481 = vunpack.c.l.b16 %v332
        %v482 = vpack.c.b16 %v475, %v474
        %v483 = vpack.c.b16 %v477, %v476
        %v484 = vpack.c.b16 %v479, %v478
        %v485 = vpack.c.b16 %v481, %v480
        %vm486 = vcmask 523264
        %v488 = vsel %vm486, %v482, 0
        %v491 = vsel %vm486, %v483, 0
        %v494 = vsel %vm486, %v484, 0
        %v497 = vsel %vm486, %v485, 0
        %499 = vmatprep.subr.bf16.mxu0 0
        %500 = vmatpush1.bf16.msra.mxu0 0
        %501 = vmatprep.subr.bf16.mxu0 0
        %502 = vmatpush1.bf16.msra.mxu0 0
        %503 = vmatprep.subr.bf16.mxu0 0
        %504 = vmatpush1.bf16.msra.mxu0 0
        %505 = vmatprep.subr.bf16.mxu0 0
        %506 = vmatpush1.bf16.msra.mxu0 0
        %507 = vmatprep.subr.bf16.mxu0 0
        %508 = vmatpush1.bf16.msra.mxu0 %v458
        %509 = vmatprep.subr.bf16.mxu0 0
        %510 = vmatpush1.bf16.msra.mxu0 %v457
        %511 = vmatprep.subr.bf16.mxu0 0
        %512 = vmatpush1.bf16.msra.mxu0 %v456
        %513 = vmatprep.subr.bf16.mxu0 0
        %514 = vmatpush1.bf16.msra.mxu0 %v455
        %515 = vmatprep.subr.bf16.mxu0 0
        %516 = vmatpush2.bf16.msra.mxu0 0
        %517 = vmatprep.subr.bf16.mxu0 0
        %518 = vmatpush2.bf16.msra.mxu0 0
        %519 = vmatprep.subr.bf16.mxu0 0
        %520 = vmatpush2.bf16.msra.mxu0 0
        %521 = vmatprep.subr.bf16.mxu0 0
        %522 = vmatpush2.bf16.msra.mxu0 0
        %523 = vmatprep.subr.bf16.mxu0 0
        %524 = vmatpush2.bf16.msra.mxu0 0
        %525 = vmatprep.subr.bf16.mxu0 0
        %526 = vmatpush2.bf16.msra.mxu0 0
        %527 = vmatprep.subr.bf16.mxu0 0
        %528 = vmatpush2.bf16.msra.mxu0 0
        %529 = vmatprep.subr.bf16.mxu0 0
        %530 = vmatpush2.bf16.msra.mxu0 0
        %531 = vmatprep.mubr.bf16.mxu0 0
        %532 = vmatmul.mubr.bf16.gmra.mxu0 %v488
        %v533 = vpop.f32.mrf.mxu0
        %v534 = vadd.f32 %v464, %v533
        %v535 = vpop.f32.mrf.mxu0
        %v536 = vpop.f32.mrf.mxu0
        %v537 = vadd.f32 %v464, %v536
        %v538 = vpop.f32.mrf.mxu0
        %539 = vmatprep.mubr.bf16.mxu0 0
        %540 = vmatmul.mubr.bf16.gmra.mxu0 %v491
        %v541 = vpop.f32.mrf.mxu0
        %v542 = vadd.f32 %v464, %v541
        %v543 = vpop.f32.mrf.mxu0
        %v544 = vpop.f32.mrf.mxu0
        %v545 = vadd.f32 %v464, %v544
        %v546 = vpop.f32.mrf.mxu0
        %547 = vmatprep.mubr.bf16.mxu0 0
        %548 = vmatmul.mubr.bf16.gmra.mxu0 %v494
        %v549 = vpop.f32.mrf.mxu0
        %v550 = vadd.f32 %v464, %v549
        %v551 = vpop.f32.mrf.mxu0
        %v552 = vpop.f32.mrf.mxu0
        %v553 = vadd.f32 %v464, %v552
        %v554 = vpop.f32.mrf.mxu0
        %555 = vmatprep.mubr.bf16.mxu0 0
        %556 = vmatmul.mubr.bf16.gmra.mxu0 %v497
        %v557 = vpop.f32.mrf.mxu0
        %v558 = vadd.f32 %v464, %v557
        %v559 = vpop.f32.mrf.mxu0
        %v560 = vpop.f32.mrf.mxu0
        %v561 = vadd.f32 %v464, %v560
        %v562 = vpop.f32.mrf.mxu0
        %563 = vdwg.mxu0
        %v564 = vmax.f32 %v534, 0.0
        %v565 = vmax.f32 %v537, 0.0
        %v566 = vmax.f32 %v542, 0.0
        %v567 = vmax.f32 %v545, 0.0
        %v568 = vmax.f32 %v550, 0.0
        %v569 = vmax.f32 %v553, 0.0
        %v570 = vmax.f32 %v558, 0.0
        %v571 = vmax.f32 %v561, 0.0
        %v572 = vpack.c.bf16 %v565, %v564
        %v573 = vpack.c.bf16 %v567, %v566
        %v574 = vpack.c.bf16 %v569, %v568
        %v575 = vpack.c.bf16 %v571, %v570
        %v576 = vld [vmem:[%s4] sm:$0xf]
        %v577 = vld [vmem:[%s4 + $0x4] sm:$0xf]
        %v578 = vld [vmem:[%s4 + $0x8] sm:$0xf]
        %v579 = vld [vmem:[%s4 + $0xc] sm:$0xf]
        %v584 = vunpack.c.l.b16 %v576
        %v585 = vunpack.c.l.b16 %v577
        %v586 = vunpack.c.l.b16 %v578
        %v587 = vunpack.c.l.b16 %v579
        %v588 = vpack.c.b16 %v585, %v584
        %v589 = vpack.c.b16 %v587, %v586
        %v593 = vsel %vm377, %v572, 0
        %v596 = vsel %vm377, %v573, 0
        %v599 = vsel %vm377, %v574, 0
        %v602 = vsel %vm377, %v575, 0
        %604 = vmatprep.subr.bf16.mxu0 0
        %605 = vmatpush1.bf16.msra.mxu0 0
        %606 = vmatprep.subr.bf16.mxu0 0
        %607 = vmatpush1.bf16.msra.mxu0 0
        %608 = vmatprep.subr.bf16.mxu0 0
        %609 = vmatpush1.bf16.msra.mxu0 0
        %610 = vmatprep.subr.bf16.mxu0 0
        %611 = vmatpush1.bf16.msra.mxu0 0
        %612 = vmatprep.subr.bf16.mxu0 0
        %613 = vmatpush1.bf16.msra.mxu0 0
        %614 = vmatprep.subr.bf16.mxu0 0
        %615 = vmatpush1.bf16.msra.mxu0 0
        %616 = vmatprep.subr.bf16.mxu0 0
        %617 = vmatpush1.bf16.msra.mxu0 %v589
        %618 = vmatprep.subr.bf16.mxu0 0
        %619 = vmatpush1.bf16.msra.mxu0 %v588
        %620 = vmatprep.subr.bf16.mxu0 0
        %621 = vmatpush2.bf16.msra.mxu0 0
        %622 = vmatprep.subr.bf16.mxu0 0
        %623 = vmatpush2.bf16.msra.mxu0 0
        %624 = vmatprep.subr.bf16.mxu0 0
        %625 = vmatpush2.bf16.msra.mxu0 0
        %626 = vmatprep.subr.bf16.mxu0 0
        %627 = vmatpush2.bf16.msra.mxu0 0
        %628 = vmatprep.subr.bf16.mxu0 0
        %629 = vmatpush2.bf16.msra.mxu0 0
        %630 = vmatprep.subr.bf16.mxu0 0
        %631 = vmatpush2.bf16.msra.mxu0 0
        %632 = vmatprep.subr.bf16.mxu0 0
        %633 = vmatpush2.bf16.msra.mxu0 0
        %634 = vmatprep.subr.bf16.mxu0 0
        %635 = vmatpush2.bf16.msra.mxu0 0
        %636 = vmatprep.mubr.bf16.mxu0 0
        %637 = vmatmul.mubr.bf16.gmra.mxu0 %v593
        %v638 = vpop.f32.mrf.mxu0
        %v639 = vadd.f32 0.0, %v638
        %v640 = vpop.f32.mrf.mxu0
        %v641 = vpop.f32.mrf.mxu0
        %v642 = vadd.f32 0.0, %v641
        %v643 = vpop.f32.mrf.mxu0
        %644 = vmatprep.mubr.bf16.mxu0 0
        %645 = vmatmul.mubr.bf16.gmra.mxu0 %v596
        %v646 = vpop.f32.mrf.mxu0
        %v647 = vadd.f32 0.0, %v646
        %v648 = vpop.f32.mrf.mxu0
        %v649 = vpop.f32.mrf.mxu0
        %v650 = vadd.f32 0.0, %v649
        %v651 = vpop.f32.mrf.mxu0
        %652 = vmatprep.mubr.bf16.mxu0 0
        %653 = vmatmul.mubr.bf16.gmra.mxu0 %v599
        %v654 = vpop.f32.mrf.mxu0
        %v655 = vadd.f32 0.0, %v654
        %v656 = vpop.f32.mrf.mxu0
        %v657 = vpop.f32.mrf.mxu0
        %v658 = vadd.f32 0.0, %v657
        %v659 = vpop.f32.mrf.mxu0
        %660 = vmatprep.mubr.bf16.mxu0 0
        %661 = vmatmul.mubr.bf16.gmra.mxu0 %v602
        %v662 = vpop.f32.mrf.mxu0
        %v663 = vadd.f32 0.0, %v662
        %v664 = vpop.f32.mrf.mxu0
        %v665 = vpop.f32.mrf.mxu0
        %v666 = vadd.f32 0.0, %v665
        %v667 = vpop.f32.mrf.mxu0
        %668 = vdwg.mxu0
        %v669 = vpack.c.bf16 %v642, %v639
        %v670 = vpack.c.bf16 %v650, %v647
        %v671 = vpack.c.bf16 %v658, %v655
        %v672 = vpack.c.bf16 %v666, %v663
        %v673 = vld [vmem:[%s5] sm:$0x1]
        %v675 = vlaneseq
        %v676 = vshrl.u32 %v675, 7
        %v677 = vsub.s32 0, %v676
        %v678 = vrot.slane %v673, %v677
        %680 = vmatprep.subr.bf16.mxu0 0
        %681 = vmatpush1.bf16.msra.mxu0 0
        %682 = vmatprep.subr.bf16.mxu0 0
        %683 = vmatpush1.bf16.msra.mxu0 0
        %684 = vmatprep.subr.bf16.mxu0 0
        %685 = vmatpush1.bf16.msra.mxu0 0
        %686 = vmatprep.subr.bf16.mxu0 0
        %687 = vmatpush1.bf16.msra.mxu0 0
        %688 = vmatprep.subr.bf16.mxu0 0
        %689 = vmatpush1.bf16.msra.mxu0 %v672
        %690 = vmatprep.subr.bf16.mxu0 0
        %691 = vmatpush1.bf16.msra.mxu0 %v671
        %692 = vmatprep.subr.bf16.mxu0 0
        %693 = vmatpush1.bf16.msra.mxu0 %v670
        %694 = vmatprep.subr.bf16.mxu0 0
        %695 = vmatpush1.bf16.msra.mxu0 %v669
        %696 = vmatprep.subr.bf16.mxu0 0
        %697 = vmatpush2.bf16.msra.mxu0 0
        %698 = vmatprep.subr.bf16.mxu0 0
        %699 = vmatpush2.bf16.msra.mxu0 0
        %700 = vmatprep.subr.bf16.mxu0 0
        %701 = vmatpush2.bf16.msra.mxu0 0
        %702 = vmatprep.subr.bf16.mxu0 0
        %703 = vmatpush2.bf16.msra.mxu0 0
        %704 = vmatprep.subr.bf16.mxu0 0
        %705 = vmatpush2.bf16.msra.mxu0 0
        %706 = vmatprep.subr.bf16.mxu0 0
        %707 = vmatpush2.bf16.msra.mxu0 0
        %708 = vmatprep.subr.bf16.mxu0 0
        %709 = vmatpush2.bf16.msra.mxu0 0
        %710 = vmatprep.subr.bf16.mxu0 0
        %711 = vmatpush2.bf16.msra.mxu0 0
        %712 = vmatprep.mubr.bf16.mxu0 0
        %713 = vmatmul.mubr.bf16.gmra.mxu0 %v488
        %v714 = vpop.f32.mrf.mxu0
        %v715 = vadd.f32 %v678, %v714
        %v716 = vpop.f32.mrf.mxu0
        %v717 = vpop.f32.mrf.mxu0
        %v718 = vadd.f32 %v678, %v717
        %v719 = vpop.f32.mrf.mxu0
        %720 = vmatprep.mubr.bf16.mxu0 0
        %721 = vmatmul.mubr.bf16.gmra.mxu0 %v491
        %v722 = vpop.f32.mrf.mxu0
        %v723 = vadd.f32 %v678, %v722
        %v724 = vpop.f32.mrf.mxu0
        %v725 = vpop.f32.mrf.mxu0
        %v726 = vadd.f32 %v678, %v725
        %v727 = vpop.f32.mrf.mxu0
        %728 = vmatprep.mubr.bf16.mxu0 0
        %729 = vmatmul.mubr.bf16.gmra.mxu0 %v494
        %v730 = vpop.f32.mrf.mxu0
        %v731 = vadd.f32 %v678, %v730
        %v732 = vpop.f32.mrf.mxu0
        %v733 = vpop.f32.mrf.mxu0
        %v734 = vadd.f32 %v678, %v733
        %v735 = vpop.f32.mrf.mxu0
        %736 = vmatprep.mubr.bf16.mxu0 0
        %737 = vmatmul.mubr.bf16.gmra.mxu0 %v497
        %v738 = vpop.f32.mrf.mxu0
        %v739 = vadd.f32 %v678, %v738
        %v740 = vpop.f32.mrf.mxu0
        %v741 = vpop.f32.mrf.mxu0
        %v742 = vadd.f32 %v678, %v741
        %v743 = vpop.f32.mrf.mxu0
        %744 = vdwg.mxu0
        %v745 = vpack.c.bf16 %v718, %v715
        %v746 = vpack.c.bf16 %v726, %v723
        %v747 = vpack.c.bf16 %v734, %v731
        %v748 = vpack.c.bf16 %v742, %v739
        %v749 = vld [vmem:[%s6] sm:$0xf]
        %v750 = vld [vmem:[%s6 + $0x4] sm:$0xf]
        %v751 = vld [vmem:[%s6 + $0x8] sm:$0xf]
        %v752 = vld [vmem:[%s6 + $0xc] sm:$0xf]
        %v753 = vld [vmem:[%s7] sm:$0x1]
        %v755 = vlaneseq
        %v756 = vshrl.u32 %v755, 7
        %v757 = vsub.s32 0, %v756
        %v758 = vrot.slane %v753, %v757
        %v764 = vunpack.c.l.b16 %v749
        %v765 = vunpack.c.l.b16 %v750
        %v766 = vunpack.c.l.b16 %v751
        %v767 = vunpack.c.l.b16 %v752
        %v768 = vpack.c.b16 %v765, %v764
        %v769 = vpack.c.b16 %v767, %v766
        %v773 = vsel %vm377, %v745, 0
        %v776 = vsel %vm377, %v746, 0
        %v779 = vsel %vm377, %v747, 0
        %v782 = vsel %vm377, %v748, 0
        %784 = vmatprep.subr.bf16.mxu0 0
        %785 = vmatpush1.bf16.msra.mxu0 0
        %786 = vmatprep.subr.bf16.mxu0 0
        %787 = vmatpush1.bf16.msra.mxu0 0
        %788 = vmatprep.subr.bf16.mxu0 0
        %789 = vmatpush1.bf16.msra.mxu0 0
        %790 = vmatprep.subr.bf16.mxu0 0
        %791 = vmatpush1.bf16.msra.mxu0 0
        %792 = vmatprep.subr.bf16.mxu0 0
        %793 = vmatpush1.bf16.msra.mxu0 0
        %794 = vmatprep.subr.bf16.mxu0 0
        %795 = vmatpush1.bf16.msra.mxu0 0
        %796 = vmatprep.subr.bf16.mxu0 0
        %797 = vmatpush1.bf16.msra.mxu0 %v769
        %798 = vmatprep.subr.bf16.mxu0 0
        %799 = vmatpush1.bf16.msra.mxu0 %v768
        %800 = vmatprep.subr.bf16.mxu0 0
        %801 = vmatpush2.bf16.msra.mxu0 0
        %802 = vmatprep.subr.bf16.mxu0 0
        %803 = vmatpush2.bf16.msra.mxu0 0
        %804 = vmatprep.subr.bf16.mxu0 0
        %805 = vmatpush2.bf16.msra.mxu0 0
        %806 = vmatprep.subr.bf16.mxu0 0
        %807 = vmatpush2.bf16.msra.mxu0 0
        %808 = vmatprep.subr.bf16.mxu0 0
        %809 = vmatpush2.bf16.msra.mxu0 0
        %810 = vmatprep.subr.bf16.mxu0 0
        %811 = vmatpush2.bf16.msra.mxu0 0
        %812 = vmatprep.subr.bf16.mxu0 0
        %813 = vmatpush2.bf16.msra.mxu0 0
        %814 = vmatprep.subr.bf16.mxu0 0
        %815 = vmatpush2.bf16.msra.mxu0 0
        %816 = vmatprep.mubr.bf16.mxu0 0
        %817 = vmatmul.mubr.bf16.gmra.mxu0 %v773
        %v818 = vpop.f32.mrf.mxu0
        %v819 = vadd.f32 %v758, %v818
        %v820 = vpop.f32.mrf.mxu0
        %v821 = vpop.f32.mrf.mxu0
        %v822 = vadd.f32 %v758, %v821
        %v823 = vpop.f32.mrf.mxu0
        %824 = vmatprep.mubr.bf16.mxu0 0
        %825 = vmatmul.mubr.bf16.gmra.mxu0 %v776
        %v826 = vpop.f32.mrf.mxu0
        %v827 = vadd.f32 %v758, %v826
        %v828 = vpop.f32.mrf.mxu0
        %v829 = vpop.f32.mrf.mxu0
        %v830 = vadd.f32 %v758, %v829
        %v831 = vpop.f32.mrf.mxu0
        %832 = vmatprep.mubr.bf16.mxu0 0
        %833 = vmatmul.mubr.bf16.gmra.mxu0 %v779
        %v834 = vpop.f32.mrf.mxu0
        %v835 = vadd.f32 %v758, %v834
        %v836 = vpop.f32.mrf.mxu0
        %v837 = vpop.f32.mrf.mxu0
        %v838 = vadd.f32 %v758, %v837
        %v839 = vpop.f32.mrf.mxu0
        %840 = vmatprep.mubr.bf16.mxu0 0
        %841 = vmatmul.mubr.bf16.gmra.mxu0 %v782
        %v842 = vpop.f32.mrf.mxu0
        %v843 = vadd.f32 %v758, %v842
        %v844 = vpop.f32.mrf.mxu0
        %v845 = vpop.f32.mrf.mxu0
        %v846 = vadd.f32 %v758, %v845
        %v847 = vpop.f32.mrf.mxu0
        %848 = vdwg.mxu0
        %857 = vrot.lane.b32.xlu0 %v819, 32
        %v858 = vpop.permute.xlu0 %857
        %859 = vrot.lane.b32.xlu0 %v822, 32
        %v860 = vpop.permute.xlu0 %859
        %861 = vrot.lane.b32.xlu0 %v827, 32
        %v862 = vpop.permute.xlu0 %861
        %863 = vrot.lane.b32.xlu0 %v830, 32
        %v864 = vpop.permute.xlu0 %863
        %865 = vrot.lane.b32.xlu0 %v835, 32
        %v866 = vpop.permute.xlu0 %865
        %867 = vrot.lane.b32.xlu0 %v838, 32
        %v868 = vpop.permute.xlu0 %867
        %869 = vrot.lane.b32.xlu0 %v843, 32
        %v870 = vpop.permute.xlu0 %869
        %871 = vrot.lane.b32.xlu0 %v846, 32
        %v872 = vpop.permute.xlu0 %871
        %v881 = vsel %vm377, %v715, %v858
        %v882 = vsel %vm377, %v718, %v860
        %v883 = vsel %vm377, %v723, %v862
        %v884 = vsel %vm377, %v726, %v864
        %v885 = vsel %vm377, %v731, %v866
        %v886 = vsel %vm377, %v734, %v868
        %v887 = vsel %vm377, %v739, %v870
        %v888 = vsel %vm377, %v742, %v872
        %vm889 = vcmask 277504
        %v890 = vsel %vm889, %v881, 0.0
        %v891 = vsel %vm889, %v882, 0.0
        %v892 = vsel %vm889, %v883, 0.0
        %v893 = vsel %vm889, %v884, 0.0
        %v894 = vsel %vm889, %v885, 0.0
        %v895 = vsel %vm889, %v886, 0.0
        %v896 = vsel %vm889, %v887, 0.0
        %v897 = vsel %vm889, %v888, 0.0
        %898 = vst [vmem:[%s313] sm:$0xff] %v890
        %899 = vst [vmem:[%s313 + $0x8] sm:$0xff] %v891
        %900 = vst [vmem:[%s313 + $0x10] sm:$0xff] %v892
        %901 = vst [vmem:[%s313 + $0x18] sm:$0xff] %v893
        %902 = vst [vmem:[%s313 + $0x20] sm:$0xff] %v894
        %903 = vst [vmem:[%s313 + $0x28] sm:$0xff] %v895
        %904 = vst [vmem:[%s313 + $0x30] sm:$0xff] %v896
        %905 = vst [vmem:[%s313 + $0x38] sm:$0xff] %v897
        %s906 = sand.u32 %s208, 1
        %s907 = scalar_lea.sflag [#allocation3], %s906
        %s908 = sand.u32 %s208, 1
        %s909 = smul.addr %s908, 64
        %s910 = scalar_lea.vmem [#allocation2], %s909
        // Predicated region
        $region53: #{tpu_custom_call.1} parent=51 // pred_check
          %p911 = pneg %p218
        $region54: #{tpu_custom_call.1} parent=51 // pred_check_branch
          %913 = sbr.rel (%p911) target = $region56
        $region55: #{tpu_custom_call.1} parent=51 // pred_region
          %s915 = ssub.s32 1024, 1024
          %916 = vsyncadd %s907, %s915
          %s917 = smul.addr %s22, 8
          %s918 = smul.addr %s917, 128
          %s919 = scalar_lea.hbm %s8, %s918
          %s920 = sshll.u32 %s910, 4
          %s921 = int_to_ptr.vmem [resolvable:$true] %s920
          %926 = dma.vmem_to_hbm [thread:$0]  %s921, 1024, %s919, %s907, 128, 128, 8
        $region56: #{tpu_custom_call.1} parent=51 // pred_fallthru
          _
      $region52: #{tpu_custom_call.1} parent=5 // pred_fallthru
        _
      %p927 = scmp.le.s32.totalorder 2, %s17
      // Predicated region
      $region57: #{tpu_custom_call.1} parent=5 // pred_check
        %p928 = pneg %p927
      $region58: #{tpu_custom_call.1} parent=5 // pred_check_branch
        %930 = sbr.rel (%p928) target = $region60
      $region59: #{tpu_custom_call.1} parent=5 // pred_region
        %s931 = ssub.s32 %s17, 2
        // Predicated region
        $region61: #{tpu_custom_call.1} parent=59 // pred_check
          %p932 = pneg %p224
        $region62: #{tpu_custom_call.1} parent=59 // pred_check_branch
          %934 = sbr.rel (%p932) target = $region64
        $region63: #{tpu_custom_call.1} parent=59 // pred_region
          %s935 = sand.u32 %s209, 1
          %s936 = scalar_lea.sflag [#allocation3], %s935
          %s937 = sand.u32 %s209, 1
          %s938 = smul.addr %s937, 64
          %s939 = scalar_lea.vmem [#allocation2], %s938
          %940 = dma.done %s936, 1024
        $region64: #{tpu_custom_call.1} parent=59 // pred_fallthru
          _
      $region60: #{tpu_custom_call.1} parent=5 // pred_fallthru
        _
    $region6: #{tpu_custom_call.1} parent=1 // loop_footer
      %s21 = sadd.s32 1, %s17
    $region7: #{tpu_custom_call.1} parent=1 // loop_footer_branch
      %16 = sbr.rel target = $region3
    $region8: #{tpu_custom_call.1} parent=1 // loop_exit
      _
    %941 = vsyncpa [#allocation3], 1
    %s942 = scalar_lea.sflag [#allocation3], 1
    %943 = vsyncpa %s942, 1

</llo_original>
